<compile_context>
chip_gen: v5e
topology: v5e:2x2
jax: 0.10.0
libtpu: 0.0.40
codegen_flags: <defaults>
</compile_context>

<pallas_src>
import functools

import jax
import jax.numpy as jnp
from jax import lax
from jax.experimental import pallas as pl
from jax.experimental.pallas import tpu as pltpu

EMB_DIM = 8
LANE = 128
BIG_TILE_N = 2048            # lane tile for large batches
SELECT_TREE_MAX_ROWS = 16    # below this, VPU select-tree beats MXU one-hot


def _gather_cols(tab, idx_row, num_rows, n_tile):
    """result[:, n] = tab[:, idx_row[0, n]]  for idx values in [0, num_rows)."""
    if num_rows <= SELECT_TREE_MAX_ROWS:
        # VPU select-tree over the (tiny, static) row count.  The index
        # broadcast is hoisted out of the loop (done once, not R times).
        idx_b = jnp.broadcast_to(idx_row, (EMB_DIM, n_tile))   # hoisted
        acc = jnp.zeros((EMB_DIM, n_tile), jnp.float32)
        for r in range(num_rows):
            col = tab[:, r:r + 1]                              # (8, 1) static slice
            acc = jnp.where(idx_b == r, col, acc)
        return acc
    # One-hot gather on the MXU: contraction over the (padded) row axis.
    r_pad = tab.shape[1]                                       # multiple of 128
    row_ids = lax.broadcasted_iota(jnp.int32, (r_pad, n_tile), 0)
    onehot = (row_ids == idx_row).astype(jnp.float32)          # (r_pad, n_tile)
    return jnp.dot(tab, onehot, preferred_element_type=jnp.float32)


def _dot_embed_kernel(users_ref, items_ref, uemb_ref, iemb_ref, out_ref,
                      *, num_user_rows, num_item_rows):
    users = users_ref[...]                                     # (1, TILE_N) int32
    items = items_ref[...]                                     # (1, TILE_N) int32
    n_tile = users.shape[1]

    u_g = _gather_cols(uemb_ref[...], users, num_user_rows, n_tile)   # (8, TILE_N)
    i_g = _gather_cols(iemb_ref[...], items, num_item_rows, n_tile)   # (8, TILE_N)

    # Fused multiply + sublane reduce over EMB_DIM -> lane-dense (1, TILE_N) row.
    out_ref[...] = jnp.sum(u_g * i_g, axis=0, keepdims=True)


@functools.partial(jax.jit, static_argnames=("num_user_rows", "num_item_rows"))
def _forward_impl(users, items, uemb_t, iemb_t, *, num_user_rows, num_item_rows):
    n = users.shape[0]

    # Tile the batch; pad to a lane-dense multiple of the tile.
    if n <= BIG_TILE_N:
        tile_n = max(LANE, pl.cdiv(n, LANE) * LANE)
        n_pad = tile_n
    else:
        tile_n = BIG_TILE_N
        n_pad = pl.cdiv(n, tile_n) * tile_n

    # Clamp (OOB guard for VMEM reads) and pad; padded lanes gather row 0 and
    # are sliced off below.
    users_i = jnp.clip(users.astype(jnp.int32), 0, num_user_rows - 1)
    items_i = jnp.clip(items.astype(jnp.int32), 0, num_item_rows - 1)
    users_p = jnp.zeros((1, n_pad), jnp.int32).at[0, :n].set(users_i)
    items_p = jnp.zeros((1, n_pad), jnp.int32).at[0, :n].set(items_i)

    kernel = functools.partial(_dot_embed_kernel,
                               num_user_rows=num_user_rows,
                               num_item_rows=num_item_rows)

    out = pl.pallas_call(
        kernel,
        out_shape=jax.ShapeDtypeStruct((1, n_pad), jnp.float32),
        grid=(n_pad // tile_n,),
        in_specs=[
            pl.BlockSpec((1, tile_n), lambda i: (0, i)),       # users tile
            pl.BlockSpec((1, tile_n), lambda i: (0, i)),       # items tile
            pl.BlockSpec(uemb_t.shape, lambda i: (0, 0)),      # user table, resident
            pl.BlockSpec(iemb_t.shape, lambda i: (0, 0)),      # item table, resident
        ],
        out_specs=pl.BlockSpec((1, tile_n), lambda i: (0, i)),
        compiler_params=pltpu.CompilerParams(
            dimension_semantics=("parallel",)),                # megacore on v7x
    )(users_p, items_p, uemb_t, iemb_t)

    return out[0, :n]


def _prepare_table(emb):
    """One-time prep: (rows, 8) -> (8, rows_padded_to_128), f32."""
    t = jnp.asarray(emb, jnp.float32).T                        # (EMB_DIM, R)
    r = t.shape[1]
    r_pad = max(LANE, pl.cdiv(r, LANE) * LANE)
    return jnp.pad(t, ((0, 0), (0, r_pad - r)))


class DummyModelPallas:
    """Pallas equivalent of DummyModel: tables prepped once at init."""

    def __init__(self, user_emb, item_emb):
        self.num_user_rows = int(user_emb.shape[0])
        self.num_item_rows = int(item_emb.shape[0])
        self.uemb_t = _prepare_table(user_emb)                 # done once, not per call
        self.iemb_t = _prepare_table(item_emb)

    def __call__(self, users, items):
        return _forward_impl(users, items, self.uemb_t, self.iemb_t,
                             num_user_rows=self.num_user_rows,
                             num_item_rows=self.num_item_rows)


if __name__ == "__main__":
    key = jax.random.PRNGKey(0)

    # --- Toy shapes implied by the module: num_users=3, num_items=10, emb dim 8.
    num_users, num_items = 3, 10
    k_user, k_item, k_u2, k_i2, k_uid, k_iid = jax.random.split(key, 6)
    user_emb = jax.random.normal(k_user, (num_users, EMB_DIM), dtype=jnp.float32)
    item_emb = jax.random.normal(k_item, (num_items, EMB_DIM), dtype=jnp.float32)

    model = DummyModelPallas(user_emb, item_emb)

    # val_df from the reference module
    users = jnp.array([0, 0, 1, 2, 2, 2], dtype=jnp.int32)
    items = jnp.array([1, 3, 5, 2, 4, 6], dtype=jnp.int32)

    out = jax.block_until_ready(model(users, items))
    ref = jnp.sum(user_emb[users] * item_emb[items], axis=1)
    assert out.shape == (users.shape[0],)
    assert jnp.allclose(out, ref, atol=1e-5, rtol=1e-5), (out, ref)

    # --- Secondary check: larger tables (exercises the MXU one-hot path) and a
    #     larger batch (exercises lane padding).
    nu2, ni2, n2 = 40, 50, 200
    user_emb2 = jax.random.normal(k_u2, (nu2, EMB_DIM), dtype=jnp.float32)
    item_emb2 = jax.random.normal(k_i2, (ni2, EMB_DIM), dtype=jnp.float32)
    users2 = jax.random.randint(k_uid, (n2,), 0, nu2, dtype=jnp.int32)
    items2 = jax.random.randint(k_iid, (n2,), 0, ni2, dtype=jnp.int32)

    model2 = DummyModelPallas(user_emb2, item_emb2)
    out2 = jax.block_until_ready(model2(users2, items2))
    ref2 = jnp.sum(user_emb2[users2] * item_emb2[items2], axis=1)
    assert out2.shape == (n2,)
    assert jnp.allclose(out2, ref2, atol=1e-4, rtol=1e-4)

    print("KERNEL_OK")
</pallas_src>

<mosaic_0001>
module attributes {stable_mosaic.version = 11 : i64} {
  func.func @_dot_embed_kernel(%arg0: i32, %arg1: memref<1x128xi32, #tpu.memory_space<vmem>>, %arg2: memref<1x128xi32, #tpu.memory_space<vmem>>, %arg3: memref<8x128xf32, #tpu.memory_space<vmem>>, %arg4: memref<8x128xf32, #tpu.memory_space<vmem>>, %arg5: memref<1x128xf32, #tpu.memory_space<vmem>>) attributes {dimension_semantics = [#tpu.dimension_semantics<parallel>], iteration_bounds = array<i64: 1>, scalar_prefetch = 0 : i64, scratch_operands = 0 : i64, tpu.core_type = #tpu.core_type<tc>, window_params = [{transform_indices = @transform_0, window_bounds = array<i64: 1, 128>}, {transform_indices = @transform_1, window_bounds = array<i64: 1, 128>}, {pipeline_mode = #tpu.pipeline_mode<synchronous>, transform_indices = @transform_2, window_bounds = array<i64: 8, 128>}, {pipeline_mode = #tpu.pipeline_mode<synchronous>, transform_indices = @transform_3, window_bounds = array<i64: 8, 128>}, {transform_indices = @transform_4, window_bounds = array<i64: 1, 128>}]} {
    %c0 = arith.constant 0 : index
    %c0_0 = arith.constant 0 : index
    %0 = vector.load %arg1[%c0, %c0_0] : memref<1x128xi32, #tpu.memory_space<vmem>>, vector<1x128xi32>
    %c0_1 = arith.constant 0 : index
    %c0_2 = arith.constant 0 : index
    %1 = vector.load %arg2[%c0_1, %c0_2] : memref<1x128xi32, #tpu.memory_space<vmem>>, vector<1x128xi32>
    %c0_3 = arith.constant 0 : index
    %c0_4 = arith.constant 0 : index
    %2 = vector.load %arg3[%c0_3, %c0_4] : memref<8x128xf32, #tpu.memory_space<vmem>>, vector<8x128xf32>
    %3 = vector.shape_cast %0 : vector<1x128xi32> to vector<1x128xi32>
    %4 = vector.broadcast %3 : vector<1x128xi32> to vector<8x128xi32>
    %cst = arith.constant 0.000000e+00 : f32
    %5 = vector.broadcast %cst : f32 to vector<8x128xf32>
    %6 = vector.extract_strided_slice %2 {offsets = [0, 0], sizes = [8, 1], strides = [1, 1]} : vector<8x128xf32> to vector<8x1xf32>
    %c0_i32 = arith.constant 0 : i32
    %7 = vector.broadcast %c0_i32 : i32 to vector<8x128xi32>
    %8 = arith.cmpi eq, %4, %7 : vector<8x128xi32>
    %9 = vector.shape_cast %6 : vector<8x1xf32> to vector<8x1xf32>
    %10 = vector.broadcast %9 : vector<8x1xf32> to vector<8x128xf32>
    %11 = arith.select %8, %10, %5 : vector<8x128xi1>, vector<8x128xf32>
    %12 = vector.extract_strided_slice %2 {offsets = [0, 1], sizes = [8, 1], strides = [1, 1]} : vector<8x128xf32> to vector<8x1xf32>
    %c1_i32 = arith.constant 1 : i32
    %13 = vector.broadcast %c1_i32 : i32 to vector<8x128xi32>
    %14 = arith.cmpi eq, %4, %13 : vector<8x128xi32>
    %15 = vector.shape_cast %12 : vector<8x1xf32> to vector<8x1xf32>
    %16 = vector.broadcast %15 : vector<8x1xf32> to vector<8x128xf32>
    %17 = arith.select %14, %16, %11 : vector<8x128xi1>, vector<8x128xf32>
    %18 = vector.extract_strided_slice %2 {offsets = [0, 2], sizes = [8, 1], strides = [1, 1]} : vector<8x128xf32> to vector<8x1xf32>
    %c2_i32 = arith.constant 2 : i32
    %19 = vector.broadcast %c2_i32 : i32 to vector<8x128xi32>
    %20 = arith.cmpi eq, %4, %19 : vector<8x128xi32>
    %21 = vector.shape_cast %18 : vector<8x1xf32> to vector<8x1xf32>
    %22 = vector.broadcast %21 : vector<8x1xf32> to vector<8x128xf32>
    %23 = arith.select %20, %22, %17 : vector<8x128xi1>, vector<8x128xf32>
    %c0_5 = arith.constant 0 : index
    %c0_6 = arith.constant 0 : index
    %24 = vector.load %arg4[%c0_5, %c0_6] : memref<8x128xf32, #tpu.memory_space<vmem>>, vector<8x128xf32>
    %25 = vector.shape_cast %1 : vector<1x128xi32> to vector<1x128xi32>
    %26 = vector.broadcast %25 : vector<1x128xi32> to vector<8x128xi32>
    %cst_7 = arith.constant 0.000000e+00 : f32
    %27 = vector.broadcast %cst_7 : f32 to vector<8x128xf32>
    %28 = vector.extract_strided_slice %24 {offsets = [0, 0], sizes = [8, 1], strides = [1, 1]} : vector<8x128xf32> to vector<8x1xf32>
    %c0_i32_8 = arith.constant 0 : i32
    %29 = vector.broadcast %c0_i32_8 : i32 to vector<8x128xi32>
    %30 = arith.cmpi eq, %26, %29 : vector<8x128xi32>
    %31 = vector.shape_cast %28 : vector<8x1xf32> to vector<8x1xf32>
    %32 = vector.broadcast %31 : vector<8x1xf32> to vector<8x128xf32>
    %33 = arith.select %30, %32, %27 : vector<8x128xi1>, vector<8x128xf32>
    %34 = vector.extract_strided_slice %24 {offsets = [0, 1], sizes = [8, 1], strides = [1, 1]} : vector<8x128xf32> to vector<8x1xf32>
    %c1_i32_9 = arith.constant 1 : i32
    %35 = vector.broadcast %c1_i32_9 : i32 to vector<8x128xi32>
    %36 = arith.cmpi eq, %26, %35 : vector<8x128xi32>
    %37 = vector.shape_cast %34 : vector<8x1xf32> to vector<8x1xf32>
    %38 = vector.broadcast %37 : vector<8x1xf32> to vector<8x128xf32>
    %39 = arith.select %36, %38, %33 : vector<8x128xi1>, vector<8x128xf32>
    %40 = vector.extract_strided_slice %24 {offsets = [0, 2], sizes = [8, 1], strides = [1, 1]} : vector<8x128xf32> to vector<8x1xf32>
    %c2_i32_10 = arith.constant 2 : i32
    %41 = vector.broadcast %c2_i32_10 : i32 to vector<8x128xi32>
    %42 = arith.cmpi eq, %26, %41 : vector<8x128xi32>
    %43 = vector.shape_cast %40 : vector<8x1xf32> to vector<8x1xf32>
    %44 = vector.broadcast %43 : vector<8x1xf32> to vector<8x128xf32>
    %45 = arith.select %42, %44, %39 : vector<8x128xi1>, vector<8x128xf32>
    %46 = vector.extract_strided_slice %24 {offsets = [0, 3], sizes = [8, 1], strides = [1, 1]} : vector<8x128xf32> to vector<8x1xf32>
    %c3_i32 = arith.constant 3 : i32
    %47 = vector.broadcast %c3_i32 : i32 to vector<8x128xi32>
    %48 = arith.cmpi eq, %26, %47 : vector<8x128xi32>
    %49 = vector.shape_cast %46 : vector<8x1xf32> to vector<8x1xf32>
    %50 = vector.broadcast %49 : vector<8x1xf32> to vector<8x128xf32>
    %51 = arith.select %48, %50, %45 : vector<8x128xi1>, vector<8x128xf32>
    %52 = vector.extract_strided_slice %24 {offsets = [0, 4], sizes = [8, 1], strides = [1, 1]} : vector<8x128xf32> to vector<8x1xf32>
    %c4_i32 = arith.constant 4 : i32
    %53 = vector.broadcast %c4_i32 : i32 to vector<8x128xi32>
    %54 = arith.cmpi eq, %26, %53 : vector<8x128xi32>
    %55 = vector.shape_cast %52 : vector<8x1xf32> to vector<8x1xf32>
    %56 = vector.broadcast %55 : vector<8x1xf32> to vector<8x128xf32>
    %57 = arith.select %54, %56, %51 : vector<8x128xi1>, vector<8x128xf32>
    %58 = vector.extract_strided_slice %24 {offsets = [0, 5], sizes = [8, 1], strides = [1, 1]} : vector<8x128xf32> to vector<8x1xf32>
    %c5_i32 = arith.constant 5 : i32
    %59 = vector.broadcast %c5_i32 : i32 to vector<8x128xi32>
    %60 = arith.cmpi eq, %26, %59 : vector<8x128xi32>
    %61 = vector.shape_cast %58 : vector<8x1xf32> to vector<8x1xf32>
    %62 = vector.broadcast %61 : vector<8x1xf32> to vector<8x128xf32>
    %63 = arith.select %60, %62, %57 : vector<8x128xi1>, vector<8x128xf32>
    %64 = vector.extract_strided_slice %24 {offsets = [0, 6], sizes = [8, 1], strides = [1, 1]} : vector<8x128xf32> to vector<8x1xf32>
    %c6_i32 = arith.constant 6 : i32
    %65 = vector.broadcast %c6_i32 : i32 to vector<8x128xi32>
    %66 = arith.cmpi eq, %26, %65 : vector<8x128xi32>
    %67 = vector.shape_cast %64 : vector<8x1xf32> to vector<8x1xf32>
    %68 = vector.broadcast %67 : vector<8x1xf32> to vector<8x128xf32>
    %69 = arith.select %66, %68, %63 : vector<8x128xi1>, vector<8x128xf32>
    %70 = vector.extract_strided_slice %24 {offsets = [0, 7], sizes = [8, 1], strides = [1, 1]} : vector<8x128xf32> to vector<8x1xf32>
    %c7_i32 = arith.constant 7 : i32
    %71 = vector.broadcast %c7_i32 : i32 to vector<8x128xi32>
    %72 = arith.cmpi eq, %26, %71 : vector<8x128xi32>
    %73 = vector.shape_cast %70 : vector<8x1xf32> to vector<8x1xf32>
    %74 = vector.broadcast %73 : vector<8x1xf32> to vector<8x128xf32>
    %75 = arith.select %72, %74, %69 : vector<8x128xi1>, vector<8x128xf32>
    %76 = vector.extract_strided_slice %24 {offsets = [0, 8], sizes = [8, 1], strides = [1, 1]} : vector<8x128xf32> to vector<8x1xf32>
    %c8_i32 = arith.constant 8 : i32
    %77 = vector.broadcast %c8_i32 : i32 to vector<8x128xi32>
    %78 = arith.cmpi eq, %26, %77 : vector<8x128xi32>
    %79 = vector.shape_cast %76 : vector<8x1xf32> to vector<8x1xf32>
    %80 = vector.broadcast %79 : vector<8x1xf32> to vector<8x128xf32>
    %81 = arith.select %78, %80, %75 : vector<8x128xi1>, vector<8x128xf32>
    %82 = vector.extract_strided_slice %24 {offsets = [0, 9], sizes = [8, 1], strides = [1, 1]} : vector<8x128xf32> to vector<8x1xf32>
    %c9_i32 = arith.constant 9 : i32
    %83 = vector.broadcast %c9_i32 : i32 to vector<8x128xi32>
    %84 = arith.cmpi eq, %26, %83 : vector<8x128xi32>
    %85 = vector.shape_cast %82 : vector<8x1xf32> to vector<8x1xf32>
    %86 = vector.broadcast %85 : vector<8x1xf32> to vector<8x128xf32>
    %87 = arith.select %84, %86, %81 : vector<8x128xi1>, vector<8x128xf32>
    %88 = arith.mulf %23, %87 : vector<8x128xf32>
    %cst_11 = arith.constant dense<0.000000e+00> : vector<128xf32>
    %89 = vector.multi_reduction <add>, %88, %cst_11 [0] : vector<8x128xf32> to vector<128xf32>
    %90 = vector.shape_cast %89 : vector<128xf32> to vector<1x128xf32>
    %c0_12 = arith.constant 0 : index
    %c0_13 = arith.constant 0 : index
    %91 = vector.load %arg5[%c0_12, %c0_13] : memref<1x128xf32, #tpu.memory_space<vmem>>, vector<1x128xf32>
    tpu.vector_store %arg5[%c0_12, %c0_13], %90 {strides = array<i32>} : memref<1x128xf32, #tpu.memory_space<vmem>>, vector<1x128xf32>,
    return
  }
  func.func @transform_0(%arg0: i32) -> (i32, i32) {
    %c0_i32 = arith.constant 0 : i32
    %c0_i32_0 = arith.constant 0 : i32
    return %c0_i32, %arg0 : i32, i32
  }
  func.func @transform_1(%arg0: i32) -> (i32, i32) {
    %c0_i32 = arith.constant 0 : i32
    %c0_i32_0 = arith.constant 0 : i32
    return %c0_i32, %arg0 : i32, i32
  }
  func.func @transform_2(%arg0: i32) -> (i32, i32) {
    %c0_i32 = arith.constant 0 : i32
    %c0_i32_0 = arith.constant 0 : i32
    %c0_i32_1 = arith.constant 0 : i32
    return %c0_i32, %c0_i32_0 : i32, i32
  }
  func.func @transform_3(%arg0: i32) -> (i32, i32) {
    %c0_i32 = arith.constant 0 : i32
    %c0_i32_0 = arith.constant 0 : i32
    %c0_i32_1 = arith.constant 0 : i32
    return %c0_i32, %c0_i32_0 : i32, i32
  }
  func.func @transform_4(%arg0: i32) -> (i32, i32) {
    %c0_i32 = arith.constant 0 : i32
    %c0_i32_0 = arith.constant 0 : i32
    return %c0_i32, %arg0 : i32, i32
  }
}

</mosaic_0001>

<llo_original>
// kernel: _forward_impl.1
$region0: #{_forward_impl.1}
  #allocation0 [shape = 'u32[]', space=smem, size = 0x4, offset = 0x4, fixed_abs, tag = 'smem constant byte address 0x4 - core index']
  #allocation1 [shape = 'u32[72,128]{1,0:T(1,128)}', space=vmem, size = 0x9000, scoped, tag = 'internal scratch']
  %s0 = inlined_call_operand.vmem [shape: s32[1,128], index: 0, kind: input, shape index: {}]
  %s1 = inlined_call_operand.vmem [shape: s32[1,128], index: 1, kind: input, shape index: {}]
  %s2 = inlined_call_operand.vmem [shape: f32[8,128], index: 2, kind: input, shape index: {}]
  %s3 = inlined_call_operand.hbm [shape: f32[8,128], index: 3, kind: input, shape index: {}]
  %s4 = inlined_call_operand.vmem [shape: f32[1,128], index: 4, kind: output, shape index: {}]
  %s5 = sld [smem:[#allocation0]]
  $region30: #{_forward_impl.1} parent=0
    _
  %s7 = ssub.s32 1, %s5
  %s8 = scalar_select 0, %s7, %s5
  $region1: #{_forward_impl.1} parent=0
    #allocation2 [shape = 'u8[4096]{0}', space=vmem, size = 0x1000, scoped, tag = 'input window, operand 3, single buffered']
    #allocation3 [shape = 's32[1]{0}', space=sflag, size = 0x4, scoped, tag = 'scoped memory for _forward_impl.1']
    %9 = vsyncpa [#allocation3], 0
    // Predicated region
    $region2: #{_forward_impl.1} parent=1 // pred_check
      _
    $region3: #{_forward_impl.1} parent=1 // pred_check_branch
      %11 = sbr.rel (0) target = $region5
    $region4: #{_forward_impl.1} parent=1 // pred_region
      _
    $region5: #{_forward_impl.1} parent=1 // pred_fallthru
      _
    // Predicated region
    $region6: #{_forward_impl.1} parent=1 // pred_check
      _
    $region7: #{_forward_impl.1} parent=1 // pred_check_branch
      %13 = sbr.rel (0) target = $region9
    $region8: #{_forward_impl.1} parent=1 // pred_region
      _
    $region9: #{_forward_impl.1} parent=1 // pred_fallthru
      _
    // Predicated region
    $region10: #{_forward_impl.1} parent=1 // pred_check
      _
    $region11: #{_forward_impl.1} parent=1 // pred_check_branch
      %15 = sbr.rel (0) target = $region13
    $region12: #{_forward_impl.1} parent=1 // pred_region
      _
    $region13: #{_forward_impl.1} parent=1 // pred_fallthru
      _
    // Predicated region
    $region14: #{_forward_impl.1} parent=1 // pred_check
      _
    $region15: #{_forward_impl.1} parent=1 // pred_check_branch
      %17 = sbr.rel (0) target = $region17
    $region16: #{_forward_impl.1} parent=1 // pred_region
      %19 = vsyncadd [#allocation3], 0
      %s21 = sshll.u32 %s3, 4
      %s22 = int_to_ptr.hbm [resolvable:$true] %s21
      %s23 = sshll.u32 [#allocation2], 4
      %s24 = int_to_ptr.vmem [resolvable:$true] %s23
      %26 = dma.hbm_to_vmem [thread:$0]  %s22, 128, %s24, [#allocation3]
    $region17: #{_forward_impl.1} parent=1 // pred_fallthru
      _
    // Predicated region
    $region18: #{_forward_impl.1} parent=1 // pred_check
      _
    $region19: #{_forward_impl.1} parent=1 // pred_check_branch
      %28 = sbr.rel (0) target = $region21
    $region20: #{_forward_impl.1} parent=1 // pred_region
      %30 = dma.done [#allocation3], 128
    $region21: #{_forward_impl.1} parent=1 // pred_fallthru
      _
    %v31 = vld [vmem:[%s0] sm:$0x1]
    %v32 = vld [vmem:[%s1] sm:$0x1]
    %v33 = vld [vmem:[%s2] sm:$0xff]
    %v34 = vperm.slane %v31, 0
    %vm35 = vcmp.eq.s32.totalorder %v34, 0
    %37 = vset.pattern.permute.xlu0 0
    %38 = vperm.xlu0 %37, %v33
    %v39 = vpop.permute.xlu0 %38
    %v41 = vsel %vm35, %v39, 0.0
    %vm42 = vcmp.eq.s32.totalorder %v34, 1
    %43 = vset.pattern.permute.xlu0 1
    %44 = vperm.xlu0 %43, %v33
    %v45 = vpop.permute.xlu0 %44
    %v47 = vsel %vm42, %v45, %v41
    %vm48 = vcmp.eq.s32.totalorder %v34, 2
    %49 = vset.pattern.permute.xlu0 2
    %50 = vperm.xlu0 %49, %v33
    %v51 = vpop.permute.xlu0 %50
    %v53 = vsel %vm48, %v51, %v47
    %v54 = vld [vmem:[#allocation2] sm:$0xff]
    %v55 = vperm.slane %v32, 0
    %vm56 = vcmp.eq.s32.totalorder %v55, 0
    %58 = vset.pattern.permute.xlu0 0
    %59 = vperm.xlu0 %58, %v54
    %v60 = vpop.permute.xlu0 %59
    %v62 = vsel %vm56, %v60, 0.0
    %vm63 = vcmp.eq.s32.totalorder %v55, 1
    %64 = vset.pattern.permute.xlu0 1
    %65 = vperm.xlu0 %64, %v54
    %v66 = vpop.permute.xlu0 %65
    %v68 = vsel %vm63, %v66, %v62
    %vm69 = vcmp.eq.s32.totalorder %v55, 2
    %70 = vset.pattern.permute.xlu0 2
    %71 = vperm.xlu0 %70, %v54
    %v72 = vpop.permute.xlu0 %71
    %v74 = vsel %vm69, %v72, %v68
    %vm75 = vcmp.eq.s32.totalorder %v55, 3
    %76 = vset.pattern.permute.xlu0 3
    %77 = vperm.xlu0 %76, %v54
    %v78 = vpop.permute.xlu0 %77
    %v80 = vsel %vm75, %v78, %v74
    %vm81 = vcmp.eq.s32.totalorder %v55, 4
    %82 = vset.pattern.permute.xlu0 4
    %83 = vperm.xlu0 %82, %v54
    %v84 = vpop.permute.xlu0 %83
    %v86 = vsel %vm81, %v84, %v80
    %vm87 = vcmp.eq.s32.totalorder %v55, 5
    %88 = vset.pattern.permute.xlu0 5
    %89 = vperm.xlu0 %88, %v54
    %v90 = vpop.permute.xlu0 %89
    %v92 = vsel %vm87, %v90, %v86
    %vm93 = vcmp.eq.s32.totalorder %v55, 6
    %94 = vset.pattern.permute.xlu0 6
    %95 = vperm.xlu0 %94, %v54
    %v96 = vpop.permute.xlu0 %95
    %v98 = vsel %vm93, %v96, %v92
    %vm99 = vcmp.eq.s32.totalorder %v55, 7
    %100 = vset.pattern.permute.xlu0 7
    %101 = vperm.xlu0 %100, %v54
    %v102 = vpop.permute.xlu0 %101
    %v104 = vsel %vm99, %v102, %v98
    %vm105 = vcmp.eq.s32.totalorder %v55, 8
    %106 = vset.pattern.permute.xlu0 8
    %107 = vperm.xlu0 %106, %v54
    %v108 = vpop.permute.xlu0 %107
    %v110 = vsel %vm105, %v108, %v104
    %vm111 = vcmp.eq.s32.totalorder %v55, 9
    %112 = vset.pattern.permute.xlu0 9
    %113 = vperm.xlu0 %112, %v54
    %v114 = vpop.permute.xlu0 %113
    %v116 = vsel %vm111, %v114, %v110
    %v117 = vmul.f32 %v53, %v116
    %v118 = vrot.slane %v117, 4
    %v119 = vadd.f32 %v117, %v118
    %v120 = vrot.slane %v119, 2
    %v121 = vadd.f32 %v119, %v120
    %v122 = vrot.slane %v121, 1
    %v123 = vadd.f32 %v121, %v122
    %124 = vst [vmem:[%s4] sm:$0x1] %v123
    // Predicated region
    $region22: #{_forward_impl.1} parent=1 // pred_check
      _
    $region23: #{_forward_impl.1} parent=1 // pred_check_branch
      %126 = sbr.rel (0) target = $region25
    $region24: #{_forward_impl.1} parent=1 // pred_region
      _
    $region25: #{_forward_impl.1} parent=1 // pred_fallthru
      _
    // Predicated region
    $region26: #{_forward_impl.1} parent=1 // pred_check
      _
    $region27: #{_forward_impl.1} parent=1 // pred_check_branch
      %128 = sbr.rel (0) target = $region29
    $region28: #{_forward_impl.1} parent=1 // pred_region
      _
    $region29: #{_forward_impl.1} parent=1 // pred_fallthru
      _
    %129 = vsyncpa [#allocation3], 1

</llo_original>
